<compile_context>
chip_gen: v5e
topology: v5e:2x2
jax: 0.10.0
libtpu: 0.0.40
codegen_flags: <defaults>
</compile_context>

<pallas_src>
import jax
import jax.numpy as jnp
from jax.experimental import pallas as pl
from jax.experimental.pallas import tpu as pltpu

_LANE = 128   # lane width: hidden dim padded to this (VMEM/MXU only, never HBM I/O)
_SUB = 8      # sublane granularity for f32 batch tiles


def _round_up(x: int, m: int) -> int:
    return ((x + m - 1) // m) * m


def _qnet_kernel(x_ref, w1_ref, b1_ref, w2_ref, b2_ref, w3_ref, b3_ref, o_ref):
    # x arrives as an unpadded f32 tile from HBM; cast to the MXU feed dtype
    # in VMEM (no wrapper-side pad/cast pass).
    x = x_ref[...].astype(w1_ref.dtype)
    # h1 = relu(x @ W1 + b1): MXU matmul, f32 accumulation, f32 epilogue
    # (v5e VPU/EUP have no bf16); re-cast only for the next MXU feed.
    h1 = jnp.dot(x, w1_ref[...], preferred_element_type=jnp.float32)
    h1 = jnp.maximum(h1 + b1_ref[...], 0.0).astype(w2_ref.dtype)
    # h2 = relu(h1 @ W2 + b2)
    h2 = jnp.dot(h1, w2_ref[...], preferred_element_type=jnp.float32)
    h2 = jnp.maximum(h2 + b2_ref[...], 0.0).astype(w3_ref.dtype)
    # q = h2 @ W3 + b3  (true num_actions width -> narrow HBM writes)
    q = jnp.dot(h2, w3_ref[...], preferred_element_type=jnp.float32)
    # TODO(synk): if the consumer is greedy action selection, fuse the argmax
    # over num_actions here and emit (tb, 1) indices instead of Q-values.
    o_ref[...] = (q + b3_ref[...]).astype(o_ref.dtype)


def prepare_params(params, compute_dtype=jnp.bfloat16):
    """One-time prep (call once, cache the result).

    Pads the *hidden* dim to a 128-lane multiple (zero padding is inert through
    matmul + ReLU) and casts weights to the MXU compute dtype. The state_dim
    (W1 rows) and num_actions (W3 cols) stay unpadded so x / q keep narrow,
    unpadded HBM layouts. Biases stay f32 (f32 epilogue).
    """
    w1, b1, w2, b2, w3, b3 = params
    hidden_dim = w1.shape[1]
    h_p = _round_up(hidden_dim, _LANE)

    def pad_cols(a, cols):
        return jnp.pad(a, ((0, 0), (0, cols - a.shape[1])))

    def pad_rows(a, rows):
        return jnp.pad(a, ((0, rows - a.shape[0]), (0, 0)))

    w1p = pad_cols(w1, h_p).astype(compute_dtype)                 # (state_dim, h_p)
    w2p = pad_cols(pad_rows(w2, h_p), h_p).astype(compute_dtype)  # (h_p, h_p)
    w3p = pad_rows(w3, h_p).astype(compute_dtype)                 # (h_p, num_actions)
    b1p = pad_cols(b1.reshape(1, -1), h_p).astype(jnp.float32)    # (1, h_p)
    b2p = pad_cols(b2.reshape(1, -1), h_p).astype(jnp.float32)    # (1, h_p)
    b3p = b3.reshape(1, -1).astype(jnp.float32)                   # (1, num_actions)
    return (w1p, b1p, w2p, b2p, w3p, b3p)


def _xla_forward(x, prepared):
    """Fused XLA dot chain (small-batch fast path), same dtype policy."""
    w1, b1, w2, b2, w3, b3 = prepared
    cd = w1.dtype
    h1 = jnp.maximum(jnp.dot(x.astype(cd), w1, preferred_element_type=jnp.float32) + b1, 0.0)
    h2 = jnp.maximum(jnp.dot(h1.astype(cd), w2, preferred_element_type=jnp.float32) + b2, 0.0)
    q = jnp.dot(h2.astype(cd), w3, preferred_element_type=jnp.float32) + b3
    return q.astype(x.dtype)


def q_network_forward(x, prepared, *, block_batch=2048, small_batch_fallback=64):
    """Fused MLP Q-network forward.

    x: (batch, state_dim) float32 (kept unpadded in HBM).
    prepared: output of prepare_params() -- padded/cast weights, f32 biases.
    Returns (batch, num_actions) in x.dtype.
    """
    w1, b1, w2, b2, w3, b3 = prepared
    batch, state_dim = x.shape
    assert w1.shape[0] == state_dim
    h_p = w2.shape[1]
    num_actions = w3.shape[1]
    out_dtype = x.dtype

    # --- small-batch fast path: pallas_call setup would dominate ------------
    if batch <= small_batch_fallback:
        return _xla_forward(x, prepared)

    # --- batch tiling: big tiles to amortize per-step overhead; keep >= 2
    #     tiles so both v7x TensorCores get work under "parallel" semantics.
    n_tiles = pl.cdiv(batch, block_batch)
    if n_tiles < 2 and batch >= 2 * _SUB:
        n_tiles = 2
    tb = _round_up(pl.cdiv(batch, n_tiles), _SUB)
    batch_p = _round_up(batch, tb)
    grid = (batch_p // tb,)

    x_in = x if batch_p == batch else jnp.pad(x, ((0, batch_p - batch), (0, 0)))

    # --- VMEM budget: double-buffered resident weights + double-buffered
    #     x/out tiles + live f32 intermediates, 2x headroom; clamp to 75% of
    #     the generation's physical VMEM (v7x: 64 MiB -> 48 MiB cap).
    mm_bytes = jnp.dtype(w1.dtype).itemsize
    io_bytes_elem = jnp.dtype(out_dtype).itemsize
    w_bytes = (state_dim * h_p + h_p * h_p + h_p * num_actions) * mm_bytes \
        + (2 * h_p + num_actions) * 4
    io_bytes = 2 * tb * (state_dim + num_actions) * io_bytes_elem
    inter_bytes = 2 * tb * h_p * 4
    estimate = 2 * (2 * w_bytes + io_bytes + inter_bytes)
    try:
        vmem_cap = int(getattr(pltpu.get_tpu_info(), "vmem_capacity_bytes", 64 << 20))
    except Exception:
        vmem_cap = 64 << 20  # conservative (v7x) fallback
    vmem_limit = int(min(max(estimate, 16 << 20), (vmem_cap * 3) // 4))

    # Weights/biases: constant index_map -> fetched once, VMEM-resident.
    def resident(shape):
        return pl.BlockSpec(shape, lambda i: (0, 0))

    out = pl.pallas_call(
        _qnet_kernel,
        out_shape=jax.ShapeDtypeStruct((batch_p, num_actions), out_dtype),
        grid=grid,
        in_specs=[
            pl.BlockSpec((tb, state_dim), lambda i: (i, 0)),   # x tile, unpadded f32
            resident((state_dim, h_p)), resident((1, h_p)),    # W1, b1
            resident((h_p, h_p)), resident((1, h_p)),          # W2, b2
            resident((h_p, num_actions)), resident((1, num_actions)),  # W3, b3
        ],
        out_specs=pl.BlockSpec((tb, num_actions), lambda i: (i, 0)),
        compiler_params=pltpu.CompilerParams(
            dimension_semantics=("parallel",),                 # batch axis -> both v7x TCs
            vmem_limit_bytes=vmem_limit,
        ),
    )(x_in, w1, b1, w2, b2, w3, b3)

    return out if batch_p == batch else out[:batch]


def init_params(key, state_dim, hidden_dim, num_actions):
    """Deterministic init mimicking nn.Linear's U(-1/sqrt(fan_in), 1/sqrt(fan_in))."""
    ks = jax.random.split(key, 6)

    def linear(kw, kb, fan_in, fan_out):
        bound = 1.0 / jnp.sqrt(jnp.float32(fan_in))
        w = jax.random.uniform(kw, (fan_in, fan_out), jnp.float32, -bound, bound)
        b = jax.random.uniform(kb, (1, fan_out), jnp.float32, -bound, bound)
        return w, b

    w1, b1 = linear(ks[0], ks[1], state_dim, hidden_dim)
    w2, b2 = linear(ks[2], ks[3], hidden_dim, hidden_dim)
    w3, b3 = linear(ks[4], ks[5], hidden_dim, num_actions)
    return (w1, b1, w2, b2, w3, b3)


def q_network_ref(x, params, compute_dtype=jnp.float32):
    """Plain-JAX reference (same per-matmul dtype policy as the kernel)."""
    w1, b1, w2, b2, w3, b3 = params
    cd = compute_dtype
    h1 = jnp.dot(x.astype(cd), w1.astype(cd), preferred_element_type=jnp.float32) + b1
    h1 = jnp.maximum(h1, 0.0)
    h2 = jnp.dot(h1.astype(cd), w2.astype(cd), preferred_element_type=jnp.float32) + b2
    h2 = jnp.maximum(h2, 0.0)
    return jnp.dot(h2.astype(cd), w3.astype(cd), preferred_element_type=jnp.float32) + b3


if __name__ == "__main__":
    state_dim, hidden_dim, num_actions = 8, 32, 4

    key = jax.random.PRNGKey(0)
    k_params, k_x, k_x2, k_x3 = jax.random.split(key, 4)

    params = init_params(k_params, state_dim, hidden_dim, num_actions)
    prepared_f32 = prepare_params(params, compute_dtype=jnp.float32)
    prepared_bf16 = prepare_params(params, compute_dtype=jnp.bfloat16)

    # Pallas path, f32 matmuls (exact vs reference), 2 batch tiles of 128 rows.
    batch = 256
    x = jax.random.normal(k_x, (batch, state_dim), jnp.float32)
    q_f32 = jax.block_until_ready(
        q_network_forward(x, prepared_f32, block_batch=128))
    assert q_f32.shape == (batch, num_actions)
    assert jnp.allclose(q_f32, q_network_ref(x, params, jnp.float32),
                        atol=1e-5, rtol=1e-5)

    # Pallas path, default bf16 MXU feeds (loose check vs bf16 reference).
    q_bf16 = jax.block_until_ready(q_network_forward(x, prepared_bf16))
    assert q_bf16.shape == (batch, num_actions)
    assert jnp.allclose(q_bf16, q_network_ref(x, params, jnp.bfloat16),
                        atol=1e-2, rtol=1e-2)

    # Ragged batch: 3 tiles, last tile zero-row-padded and row-sliced back.
    batch2 = 300
    x2 = jax.random.normal(k_x2, (batch2, state_dim), jnp.float32)
    q2 = jax.block_until_ready(
        q_network_forward(x2, prepared_f32, block_batch=128))
    assert q2.shape == (batch2, num_actions)
    assert jnp.allclose(q2, q_network_ref(x2, params, jnp.float32),
                        atol=1e-5, rtol=1e-5)

    # Tiny RL batch -> small-batch XLA fast path.
    x3 = jax.random.normal(k_x3, (2, state_dim), jnp.float32)
    q3 = jax.block_until_ready(q_network_forward(x3, prepared_f32))
    assert q3.shape == (2, num_actions)
    assert jnp.allclose(q3, q_network_ref(x3, params, jnp.float32),
                        atol=1e-5, rtol=1e-5)

    print("KERNEL_OK")
</pallas_src>

<mosaic_0001>
module attributes {stable_mosaic.version = 11 : i64} {
  func.func @_qnet_kernel(%arg0: i32, %arg1: memref<128x8xf32, #tpu.memory_space<vmem>>, %arg2: memref<8x128xf32, #tpu.memory_space<vmem>>, %arg3: memref<1x128xf32, #tpu.memory_space<vmem>>, %arg4: memref<128x128xf32, #tpu.memory_space<vmem>>, %arg5: memref<1x128xf32, #tpu.memory_space<vmem>>, %arg6: memref<128x4xf32, #tpu.memory_space<vmem>>, %arg7: memref<1x4xf32, #tpu.memory_space<vmem>>, %arg8: memref<128x4xf32, #tpu.memory_space<vmem>>) attributes {dimension_semantics = [#tpu.dimension_semantics<parallel>], iteration_bounds = array<i64: 2>, scalar_prefetch = 0 : i64, scratch_operands = 0 : i64, tpu.core_type = #tpu.core_type<tc>, window_params = [{transform_indices = @transform_0, window_bounds = array<i64: 128, 8>}, {pipeline_mode = #tpu.pipeline_mode<synchronous>, transform_indices = @transform_1, window_bounds = array<i64: 8, 128>}, {pipeline_mode = #tpu.pipeline_mode<synchronous>, transform_indices = @transform_2, window_bounds = array<i64: 1, 128>}, {pipeline_mode = #tpu.pipeline_mode<synchronous>, transform_indices = @transform_3, window_bounds = array<i64: 128, 128>}, {pipeline_mode = #tpu.pipeline_mode<synchronous>, transform_indices = @transform_4, window_bounds = array<i64: 1, 128>}, {pipeline_mode = #tpu.pipeline_mode<synchronous>, transform_indices = @transform_5, window_bounds = array<i64: 128, 4>}, {pipeline_mode = #tpu.pipeline_mode<synchronous>, transform_indices = @transform_6, window_bounds = array<i64: 1, 4>}, {transform_indices = @transform_7, window_bounds = array<i64: 128, 4>}]} {
    %c0 = arith.constant 0 : index
    %c0_0 = arith.constant 0 : index
    %0 = vector.load %arg1[%c0, %c0_0] : memref<128x8xf32, #tpu.memory_space<vmem>>, vector<128x8xf32>
    %c0_1 = arith.constant 0 : index
    %c0_2 = arith.constant 0 : index
    %1 = vector.load %arg2[%c0_1, %c0_2] : memref<8x128xf32, #tpu.memory_space<vmem>>, vector<8x128xf32>
    %cst = arith.constant dense<0.000000e+00> : vector<128x128xf32>
    %2 = tpu.matmul %0, %1, %cst {dimension_numbers = #tpu.dot_dimension_numbers<[1], [0], [0], [1], [0, 0, 1, 1], [], []>} : vector<128x8xf32>, vector<8x128xf32>, vector<128x128xf32> -> vector<128x128xf32>
    %c0_3 = arith.constant 0 : index
    %c0_4 = arith.constant 0 : index
    %3 = vector.load %arg3[%c0_3, %c0_4] : memref<1x128xf32, #tpu.memory_space<vmem>>, vector<1x128xf32>
    %4 = vector.broadcast %3 : vector<1x128xf32> to vector<128x128xf32>
    %5 = arith.addf %2, %4 : vector<128x128xf32>
    %cst_5 = arith.constant 0.000000e+00 : f32
    %6 = vector.broadcast %cst_5 : f32 to vector<128x128xf32>
    %7 = arith.maximumf %5, %6 : vector<128x128xf32>
    %c0_6 = arith.constant 0 : index
    %c0_7 = arith.constant 0 : index
    %8 = vector.load %arg4[%c0_6, %c0_7] : memref<128x128xf32, #tpu.memory_space<vmem>>, vector<128x128xf32>
    %cst_8 = arith.constant dense<0.000000e+00> : vector<128x128xf32>
    %9 = tpu.matmul %7, %8, %cst_8 {dimension_numbers = #tpu.dot_dimension_numbers<[1], [0], [0], [1], [0, 0, 1, 1], [], []>} : vector<128x128xf32>, vector<128x128xf32>, vector<128x128xf32> -> vector<128x128xf32>
    %c0_9 = arith.constant 0 : index
    %c0_10 = arith.constant 0 : index
    %10 = vector.load %arg5[%c0_9, %c0_10] : memref<1x128xf32, #tpu.memory_space<vmem>>, vector<1x128xf32>
    %11 = vector.broadcast %10 : vector<1x128xf32> to vector<128x128xf32>
    %12 = arith.addf %9, %11 : vector<128x128xf32>
    %cst_11 = arith.constant 0.000000e+00 : f32
    %13 = vector.broadcast %cst_11 : f32 to vector<128x128xf32>
    %14 = arith.maximumf %12, %13 : vector<128x128xf32>
    %c0_12 = arith.constant 0 : index
    %c0_13 = arith.constant 0 : index
    %15 = vector.load %arg6[%c0_12, %c0_13] : memref<128x4xf32, #tpu.memory_space<vmem>>, vector<128x4xf32>
    %cst_14 = arith.constant dense<0.000000e+00> : vector<128x4xf32>
    %16 = tpu.matmul %14, %15, %cst_14 {dimension_numbers = #tpu.dot_dimension_numbers<[1], [0], [0], [1], [0, 0, 1, 1], [], []>} : vector<128x128xf32>, vector<128x4xf32>, vector<128x4xf32> -> vector<128x4xf32>
    %c0_15 = arith.constant 0 : index
    %c0_16 = arith.constant 0 : index
    %17 = vector.load %arg7[%c0_15, %c0_16] : memref<1x4xf32, #tpu.memory_space<vmem>>, vector<1x4xf32>
    %18 = vector.broadcast %17 : vector<1x4xf32> to vector<128x4xf32>
    %19 = arith.addf %16, %18 : vector<128x4xf32>
    %c0_17 = arith.constant 0 : index
    %c0_18 = arith.constant 0 : index
    %20 = vector.load %arg8[%c0_17, %c0_18] : memref<128x4xf32, #tpu.memory_space<vmem>>, vector<128x4xf32>
    tpu.vector_store %arg8[%c0_17, %c0_18], %19 {strides = array<i32>} : memref<128x4xf32, #tpu.memory_space<vmem>>, vector<128x4xf32>,
    return
  }
  func.func @transform_0(%arg0: i32) -> (i32, i32) {
    %c0_i32 = arith.constant 0 : i32
    %c0_i32_0 = arith.constant 0 : i32
    return %arg0, %c0_i32 : i32, i32
  }
  func.func @transform_1(%arg0: i32) -> (i32, i32) {
    %c0_i32 = arith.constant 0 : i32
    %c0_i32_0 = arith.constant 0 : i32
    %c0_i32_1 = arith.constant 0 : i32
    return %c0_i32, %c0_i32_0 : i32, i32
  }
  func.func @transform_2(%arg0: i32) -> (i32, i32) {
    %c0_i32 = arith.constant 0 : i32
    %c0_i32_0 = arith.constant 0 : i32
    %c0_i32_1 = arith.constant 0 : i32
    return %c0_i32, %c0_i32_0 : i32, i32
  }
  func.func @transform_3(%arg0: i32) -> (i32, i32) {
    %c0_i32 = arith.constant 0 : i32
    %c0_i32_0 = arith.constant 0 : i32
    %c0_i32_1 = arith.constant 0 : i32
    return %c0_i32, %c0_i32_0 : i32, i32
  }
  func.func @transform_4(%arg0: i32) -> (i32, i32) {
    %c0_i32 = arith.constant 0 : i32
    %c0_i32_0 = arith.constant 0 : i32
    %c0_i32_1 = arith.constant 0 : i32
    return %c0_i32, %c0_i32_0 : i32, i32
  }
  func.func @transform_5(%arg0: i32) -> (i32, i32) {
    %c0_i32 = arith.constant 0 : i32
    %c0_i32_0 = arith.constant 0 : i32
    %c0_i32_1 = arith.constant 0 : i32
    return %c0_i32, %c0_i32_0 : i32, i32
  }
  func.func @transform_6(%arg0: i32) -> (i32, i32) {
    %c0_i32 = arith.constant 0 : i32
    %c0_i32_0 = arith.constant 0 : i32
    %c0_i32_1 = arith.constant 0 : i32
    return %c0_i32, %c0_i32_0 : i32, i32
  }
  func.func @transform_7(%arg0: i32) -> (i32, i32) {
    %c0_i32 = arith.constant 0 : i32
    %c0_i32_0 = arith.constant 0 : i32
    return %arg0, %c0_i32 : i32, i32
  }
}

</mosaic_0001>

<llo_original>
// kernel: tpu_custom_call.1
$region0: #{tpu_custom_call.1}
  #allocation0 [shape = 'u32[]', space=smem, size = 0x4, offset = 0x4, fixed_abs, tag = 'smem constant byte address 0x4 - core index']
  #allocation1 [shape = 'u32[72,128]{1,0:T(1,128)}', space=vmem, size = 0x9000, scoped, tag = 'internal scratch']
  %s0 = inlined_call_operand.vmem [shape: f32[256,8], index: 0, kind: input, shape index: {}]
  %s1 = inlined_call_operand.vmem [shape: f32[8,128], index: 1, kind: input, shape index: {}]
  %s2 = inlined_call_operand.vmem [shape: f32[1,128], index: 2, kind: input, shape index: {}]
  %s3 = inlined_call_operand.vmem [shape: f32[128,128], index: 3, kind: input, shape index: {}]
  %s4 = inlined_call_operand.vmem [shape: f32[1,128], index: 4, kind: input, shape index: {}]
  %s5 = inlined_call_operand.vmem [shape: f32[128,4], index: 5, kind: input, shape index: {}]
  %s6 = inlined_call_operand.vmem [shape: f32[1,4], index: 6, kind: input, shape index: {}]
  %s7 = inlined_call_operand.vmem [shape: f32[256,4], index: 7, kind: output, shape index: {}]
  %s8 = sld [smem:[#allocation0]]
  $region61: #{tpu_custom_call.1} parent=0
    _
  %s10 = ssub.s32 1, %s8
  %s11 = scalar_select 0, %s10, %s8
  loop: start=0, step=1, limit=4
  $region2: #{tpu_custom_call.1} parent=0 // loop_pre_header
    _
  $region3: #{tpu_custom_call.1} parent=0 // loop_header
    %s13 = sphi 0, %s17
    %p14 = scmp.ge.s32.totalorder %s13, 4
    %s23 = sphi 0, %s25
    %s26 = sphi 0, %s23
    %s27 = sphi 0, %s26
    %s43 = sphi 0, %s27
    %s47 = sphi 0, %s47
    %s49 = sphi 0, %s47
    %s50 = sphi 0, %s49
    %s64 = sphi 0, %s50
    %s68 = sphi 0, %s68
    %s70 = sphi 0, %s68
    %s71 = sphi 0, %s70
    %s85 = sphi 0, %s71
    %s89 = sphi 0, %s89
    %s91 = sphi 0, %s89
    %s92 = sphi 0, %s91
    %s106 = sphi 0, %s92
    %s110 = sphi 0, %s110
    %s112 = sphi 0, %s110
    %s113 = sphi 0, %s112
    %s127 = sphi 0, %s113
    %s131 = sphi 0, %s131
    %s133 = sphi 0, %s131
    %s134 = sphi 0, %s133
    %s148 = sphi 0, %s134
    %s152 = sphi 0, %s152
    %s154 = sphi 0, %s152
    %s155 = sphi 0, %s154
    %s169 = sphi 0, %s155
    %s175 = sphi 0, %s177
    %s178 = sphi 0, %s175
    %s179 = sphi 0, %s178
    %s195 = sphi 0, %s179
  $region4: #{tpu_custom_call.1} parent=0 // loop_header_branch
    %16 = sbr.rel (%p14) target = $region8
  $region5: #{tpu_custom_call.1} parent=0 // loop_body
    %s18 = ssub.s32 %s13, 1
    %s19 = ssub.s32 %s13, 2
    %s20 = sadd.s32 %s13, 1
    %s21 = ssub.s32 %s13, %s20
    %p22 = scmp.eq.s32.totalorder %s21, 0
    %s24 = sadd.s32 %s23, 1
    %s25 = scalar_select %p22, %s23, %s24
    %p28 = pneg %p22
    %p29 = scmp.eq.s32.totalorder %s13, 1
    %p30 = por %p28, %p29
    %p31 = scmp.ne.s32.totalorder %s23, %s26
    %p32 = scmp.eq.s32.totalorder %s13, 0
    %p33 = por %p31, %p32
    %p34 = scmp.ne.s32.totalorder %s23, %s26
    %p35 = scmp.eq.s32.totalorder %s18, 1
    %p36 = por %p34, %p35
    %p37 = scmp.ne.s32.totalorder %s26, %s27
    %p38 = scmp.eq.s32.totalorder %s18, 0
    %p39 = por %p37, %p38
    %p40 = scmp.ne.s32.totalorder %s26, %s27
    %p41 = scmp.eq.s32.totalorder %s19, 1
    %p42 = por %p40, %p41
    %p44 = scmp.ne.s32.totalorder %s27, %s43
    %p45 = scmp.eq.s32.totalorder %s19, 0
    %p46 = por %p44, %p45
    %s48 = sadd.s32 %s47, 1
    %p51 = scmp.eq.s32.totalorder %s13, 1
    %p52 = scmp.ne.s32.totalorder %s47, %s49
    %p53 = scmp.eq.s32.totalorder %s13, 0
    %p54 = por %p52, %p53
    %p55 = scmp.ne.s32.totalorder %s47, %s49
    %p56 = scmp.eq.s32.totalorder %s18, 1
    %p57 = por %p55, %p56
    %p58 = scmp.ne.s32.totalorder %s49, %s50
    %p59 = scmp.eq.s32.totalorder %s18, 0
    %p60 = por %p58, %p59
    %p61 = scmp.ne.s32.totalorder %s49, %s50
    %p62 = scmp.eq.s32.totalorder %s19, 1
    %p63 = por %p61, %p62
    %p65 = scmp.ne.s32.totalorder %s50, %s64
    %p66 = scmp.eq.s32.totalorder %s19, 0
    %p67 = por %p65, %p66
    %s69 = sadd.s32 %s68, 1
    %p72 = scmp.eq.s32.totalorder %s13, 1
    %p73 = scmp.ne.s32.totalorder %s68, %s70
    %p74 = scmp.eq.s32.totalorder %s13, 0
    %p75 = por %p73, %p74
    %p76 = scmp.ne.s32.totalorder %s68, %s70
    %p77 = scmp.eq.s32.totalorder %s18, 1
    %p78 = por %p76, %p77
    %p79 = scmp.ne.s32.totalorder %s70, %s71
    %p80 = scmp.eq.s32.totalorder %s18, 0
    %p81 = por %p79, %p80
    %p82 = scmp.ne.s32.totalorder %s70, %s71
    %p83 = scmp.eq.s32.totalorder %s19, 1
    %p84 = por %p82, %p83
    %p86 = scmp.ne.s32.totalorder %s71, %s85
    %p87 = scmp.eq.s32.totalorder %s19, 0
    %p88 = por %p86, %p87
    %s90 = sadd.s32 %s89, 1
    %p93 = scmp.eq.s32.totalorder %s13, 1
    %p94 = scmp.ne.s32.totalorder %s89, %s91
    %p95 = scmp.eq.s32.totalorder %s13, 0
    %p96 = por %p94, %p95
    %p97 = scmp.ne.s32.totalorder %s89, %s91
    %p98 = scmp.eq.s32.totalorder %s18, 1
    %p99 = por %p97, %p98
    %p100 = scmp.ne.s32.totalorder %s91, %s92
    %p101 = scmp.eq.s32.totalorder %s18, 0
    %p102 = por %p100, %p101
    %p103 = scmp.ne.s32.totalorder %s91, %s92
    %p104 = scmp.eq.s32.totalorder %s19, 1
    %p105 = por %p103, %p104
    %p107 = scmp.ne.s32.totalorder %s92, %s106
    %p108 = scmp.eq.s32.totalorder %s19, 0
    %p109 = por %p107, %p108
    %s111 = sadd.s32 %s110, 1
    %p114 = scmp.eq.s32.totalorder %s13, 1
    %p115 = scmp.ne.s32.totalorder %s110, %s112
    %p116 = scmp.eq.s32.totalorder %s13, 0
    %p117 = por %p115, %p116
    %p118 = scmp.ne.s32.totalorder %s110, %s112
    %p119 = scmp.eq.s32.totalorder %s18, 1
    %p120 = por %p118, %p119
    %p121 = scmp.ne.s32.totalorder %s112, %s113
    %p122 = scmp.eq.s32.totalorder %s18, 0
    %p123 = por %p121, %p122
    %p124 = scmp.ne.s32.totalorder %s112, %s113
    %p125 = scmp.eq.s32.totalorder %s19, 1
    %p126 = por %p124, %p125
    %p128 = scmp.ne.s32.totalorder %s113, %s127
    %p129 = scmp.eq.s32.totalorder %s19, 0
    %p130 = por %p128, %p129
    %s132 = sadd.s32 %s131, 1
    %p135 = scmp.eq.s32.totalorder %s13, 1
    %p136 = scmp.ne.s32.totalorder %s131, %s133
    %p137 = scmp.eq.s32.totalorder %s13, 0
    %p138 = por %p136, %p137
    %p139 = scmp.ne.s32.totalorder %s131, %s133
    %p140 = scmp.eq.s32.totalorder %s18, 1
    %p141 = por %p139, %p140
    %p142 = scmp.ne.s32.totalorder %s133, %s134
    %p143 = scmp.eq.s32.totalorder %s18, 0
    %p144 = por %p142, %p143
    %p145 = scmp.ne.s32.totalorder %s133, %s134
    %p146 = scmp.eq.s32.totalorder %s19, 1
    %p147 = por %p145, %p146
    %p149 = scmp.ne.s32.totalorder %s134, %s148
    %p150 = scmp.eq.s32.totalorder %s19, 0
    %p151 = por %p149, %p150
    %s153 = sadd.s32 %s152, 1
    %p156 = scmp.eq.s32.totalorder %s13, 1
    %p157 = scmp.ne.s32.totalorder %s152, %s154
    %p158 = scmp.eq.s32.totalorder %s13, 0
    %p159 = por %p157, %p158
    %p160 = scmp.ne.s32.totalorder %s152, %s154
    %p161 = scmp.eq.s32.totalorder %s18, 1
    %p162 = por %p160, %p161
    %p163 = scmp.ne.s32.totalorder %s154, %s155
    %p164 = scmp.eq.s32.totalorder %s18, 0
    %p165 = por %p163, %p164
    %p166 = scmp.ne.s32.totalorder %s154, %s155
    %p167 = scmp.eq.s32.totalorder %s19, 1
    %p168 = por %p166, %p167
    %p170 = scmp.ne.s32.totalorder %s155, %s169
    %p171 = scmp.eq.s32.totalorder %s19, 0
    %p172 = por %p170, %p171
    %s173 = ssub.s32 %s13, %s20
    %p174 = scmp.eq.s32.totalorder %s173, 0
    %s176 = sadd.s32 %s175, 1
    %s177 = scalar_select %p174, %s175, %s176
    %p180 = pneg %p174
    %p181 = scmp.eq.s32.totalorder %s13, 1
    %p182 = por %p180, %p181
    %p183 = scmp.ne.s32.totalorder %s175, %s178
    %p184 = scmp.eq.s32.totalorder %s13, 0
    %p185 = por %p183, %p184
    %p186 = scmp.ne.s32.totalorder %s175, %s178
    %p187 = scmp.eq.s32.totalorder %s18, 1
    %p188 = por %p186, %p187
    %p189 = scmp.ne.s32.totalorder %s178, %s179
    %p190 = scmp.eq.s32.totalorder %s18, 0
    %p191 = por %p189, %p190
    %p192 = scmp.ne.s32.totalorder %s178, %s179
    %p193 = scmp.eq.s32.totalorder %s19, 1
    %p194 = por %p192, %p193
    %p196 = scmp.ne.s32.totalorder %s179, %s195
    %p197 = scmp.eq.s32.totalorder %s19, 0
    %p198 = por %p196, %p197
    %p199 = scmp.le.s32.totalorder 1, %s13
    %p200 = scmp.lt.s32.totalorder %s13, 3
    %p201 = pnand %p199, %p200
    %p202 = pneg %p201
    // Predicated region
    $region9: #{tpu_custom_call.1} parent=5 // pred_check
      _
    $region10: #{tpu_custom_call.1} parent=5 // pred_check_branch
      %204 = sbr.rel (%p201) target = $region12
    $region11: #{tpu_custom_call.1} parent=5 // pred_region
      %s205 = ssub.s32 %s13, 1
      // Predicated region
      $region13: #{tpu_custom_call.1} parent=11 // pred_check
        %p206 = pneg %p60
      $region14: #{tpu_custom_call.1} parent=11 // pred_check_branch
        %208 = sbr.rel (%p206) target = $region16
      $region15: #{tpu_custom_call.1} parent=11 // pred_region
        _
      $region16: #{tpu_custom_call.1} parent=11 // pred_fallthru
        _
      // Predicated region
      $region17: #{tpu_custom_call.1} parent=11 // pred_check
        %p209 = pneg %p81
      $region18: #{tpu_custom_call.1} parent=11 // pred_check_branch
        %211 = sbr.rel (%p209) target = $region20
      $region19: #{tpu_custom_call.1} parent=11 // pred_region
        _
      $region20: #{tpu_custom_call.1} parent=11 // pred_fallthru
        _
      // Predicated region
      $region21: #{tpu_custom_call.1} parent=11 // pred_check
        %p212 = pneg %p102
      $region22: #{tpu_custom_call.1} parent=11 // pred_check_branch
        %214 = sbr.rel (%p212) target = $region24
      $region23: #{tpu_custom_call.1} parent=11 // pred_region
        _
      $region24: #{tpu_custom_call.1} parent=11 // pred_fallthru
        _
      // Predicated region
      $region25: #{tpu_custom_call.1} parent=11 // pred_check
        %p215 = pneg %p123
      $region26: #{tpu_custom_call.1} parent=11 // pred_check_branch
        %217 = sbr.rel (%p215) target = $region28
      $region27: #{tpu_custom_call.1} parent=11 // pred_region
        _
      $region28: #{tpu_custom_call.1} parent=11 // pred_fallthru
        _
      // Predicated region
      $region29: #{tpu_custom_call.1} parent=11 // pred_check
        %p218 = pneg %p144
      $region30: #{tpu_custom_call.1} parent=11 // pred_check_branch
        %220 = sbr.rel (%p218) target = $region32
      $region31: #{tpu_custom_call.1} parent=11 // pred_region
        _
      $region32: #{tpu_custom_call.1} parent=11 // pred_fallthru
        _
      // Predicated region
      $region33: #{tpu_custom_call.1} parent=11 // pred_check
        %p221 = pneg %p165
      $region34: #{tpu_custom_call.1} parent=11 // pred_check_branch
        %223 = sbr.rel (%p221) target = $region36
      $region35: #{tpu_custom_call.1} parent=11 // pred_region
        _
      $region36: #{tpu_custom_call.1} parent=11 // pred_fallthru
        _
    $region12: #{tpu_custom_call.1} parent=5 // pred_fallthru
      _
    %p224 = scmp.lt.s32.totalorder %s13, 2
    // Predicated region
    $region37: #{tpu_custom_call.1} parent=5 // pred_check
      %p225 = pneg %p224
    $region38: #{tpu_custom_call.1} parent=5 // pred_check_branch
      %227 = sbr.rel (%p225) target = $region40
    $region39: #{tpu_custom_call.1} parent=5 // pred_region
      // Predicated region
      $region41: #{tpu_custom_call.1} parent=39 // pred_check
        %p228 = pneg %p33
      $region42: #{tpu_custom_call.1} parent=39 // pred_check_branch
        %230 = sbr.rel (%p228) target = $region44
      $region43: #{tpu_custom_call.1} parent=39 // pred_region
        %s231 = smul.u32 16, %s13
        %p232 = scmp.lt.s32.totalorder %s231, 31
        %s233 = scalar_select %p232, %s231, 31
        %s234 = smul.addr %s233, 8
        %s235 = scalar_lea.vmem %s0, %s234
        %s236 = smul.u32 16, %s13
      $region44: #{tpu_custom_call.1} parent=39 // pred_fallthru
        _
    $region40: #{tpu_custom_call.1} parent=5 // pred_fallthru
      _
    %p237 = scmp.le.s32.totalorder 1, %s13
    %p238 = scmp.lt.s32.totalorder %s13, 3
    %p239 = pnand %p237, %p238
    %p240 = pneg %p239
    // Predicated region
    $region45: #{tpu_custom_call.1} parent=5 // pred_check
      _
    $region46: #{tpu_custom_call.1} parent=5 // pred_check_branch
      %242 = sbr.rel (%p239) target = $region48
    $region47: #{tpu_custom_call.1} parent=5 // pred_region
      %s243 = ssub.s32 %s13, 1
      %s244 = smul.u32 16, %s18
      %p245 = scmp.lt.s32.totalorder %s244, 31
      %s246 = scalar_select %p245, %s244, 31
      %s247 = smul.addr %s246, 8
      %s248 = scalar_lea.vmem %s0, %s247
      %p249 = pneg %p39
      %p250 = pneg %p36
      %p251 = pneg %p60
      %p252 = pneg %p57
      %p253 = pneg %p81
      %p254 = pneg %p78
      %p255 = pneg %p102
      %p256 = pneg %p99
      %p257 = pneg %p123
      %p258 = pneg %p120
      %p259 = pneg %p144
      %p260 = pneg %p141
      %p261 = pneg %p165
      %p262 = pneg %p162
      %p263 = pneg %p191
      %p264 = pneg %p188
      %s265 = smul.u32 16, %s18
      %p266 = scmp.lt.s32.totalorder %s265, 31
      %s267 = scalar_select %p266, %s265, 31
      %s268 = smul.addr %s267, 8
      %s269 = scalar_lea.vmem %s7, %s268
      %s270 = smul.u32 16, %s18
      %p271 = scmp.lt.s32.totalorder %s270, 31
      %s272 = scalar_select %p271, %s270, 31
      %s273 = smul.addr %s272, 8
      %s274 = scalar_lea.vmem %s0, %s273
      %s275 = smul.u32 16, %s18
      %s276 = smul.u32 16, %s18
      %p277 = scmp.lt.s32.totalorder %s276, 31
      %s278 = scalar_select %p277, %s276, 31
      %s279 = smul.addr %s278, 8
      %s280 = scalar_lea.vmem %s7, %s279
      %s281 = smul.u32 16, %s18
      %v282 = vld [vmem:[%s274] sm:$0xff]
      %v283 = vld [vmem:[%s274 + $0x8] sm:$0xff]
      %v284 = vld [vmem:[%s274 + $0x10] sm:$0xff]
      %v285 = vld [vmem:[%s274 + $0x18] sm:$0xff]
      %v286 = vld [vmem:[%s274 + $0x20] sm:$0xff]
      %v287 = vld [vmem:[%s274 + $0x28] sm:$0xff]
      %v288 = vld [vmem:[%s274 + $0x30] sm:$0xff]
      %v289 = vld [vmem:[%s274 + $0x38] sm:$0xff]
      %v290 = vld [vmem:[%s274 + $0x40] sm:$0xff]
      %v291 = vld [vmem:[%s274 + $0x48] sm:$0xff]
      %v292 = vld [vmem:[%s274 + $0x50] sm:$0xff]
      %v293 = vld [vmem:[%s274 + $0x58] sm:$0xff]
      %v294 = vld [vmem:[%s274 + $0x60] sm:$0xff]
      %v295 = vld [vmem:[%s274 + $0x68] sm:$0xff]
      %v296 = vld [vmem:[%s274 + $0x70] sm:$0xff]
      %v297 = vld [vmem:[%s274 + $0x78] sm:$0xff]
      %v298 = vld [vmem:[%s1] sm:$0xff]
      %v299 = vld [vmem:[%s2] sm:$0x1]
      %v301 = vperm.slane %v299, 0
      %vm303 = vcmask 64512
      %v305 = vsel %vm303, %v282, 0
      %v308 = vsel %vm303, %v283, 0
      %v311 = vsel %vm303, %v284, 0
      %v314 = vsel %vm303, %v285, 0
      %v317 = vsel %vm303, %v286, 0
      %v320 = vsel %vm303, %v287, 0
      %v323 = vsel %vm303, %v288, 0
      %v326 = vsel %vm303, %v289, 0
      %v329 = vsel %vm303, %v290, 0
      %v332 = vsel %vm303, %v291, 0
      %v335 = vsel %vm303, %v292, 0
      %v338 = vsel %vm303, %v293, 0
      %v341 = vsel %vm303, %v294, 0
      %v344 = vsel %vm303, %v295, 0
      %v347 = vsel %vm303, %v296, 0
      %v350 = vsel %vm303, %v297, 0
      %352 = vmatpush.msra.mxu0 0.0
      %353 = vmatpush.msra.mxu0 0.0
      %354 = vmatpush.msra.mxu0 0.0
      %355 = vmatpush.msra.mxu0 0.0
      %356 = vmatpush.msra.mxu0 0.0
      %357 = vmatpush.msra.mxu0 0.0
      %358 = vmatpush.msra.mxu0 0.0
      %359 = vmatpush.msra.mxu0 0.0
      %360 = vmatpush.msra.mxu0 0.0
      %361 = vmatpush.msra.mxu0 0.0
      %362 = vmatpush.msra.mxu0 0.0
      %363 = vmatpush.msra.mxu0 0.0
      %364 = vmatpush.msra.mxu0 0.0
      %365 = vmatpush.msra.mxu0 0.0
      %366 = vmatpush.msra.mxu0 0.0
      %367 = vmatpush.msra.mxu0 %v298
      %368 = vmatmul.f32.gmra.mxu0 %v305
      %v369 = vpop.f32.mrf.mxu0
      %v370 = vadd.f32 %v301, %v369
      %371 = vmatmul.f32.gmra.mxu0 %v308
      %v372 = vpop.f32.mrf.mxu0
      %v373 = vadd.f32 %v301, %v372
      %374 = vmatmul.f32.gmra.mxu0 %v311
      %v375 = vpop.f32.mrf.mxu0
      %v376 = vadd.f32 %v301, %v375
      %377 = vmatmul.f32.gmra.mxu0 %v314
      %v378 = vpop.f32.mrf.mxu0
      %v379 = vadd.f32 %v301, %v378
      %380 = vmatmul.f32.gmra.mxu0 %v317
      %v381 = vpop.f32.mrf.mxu0
      %v382 = vadd.f32 %v301, %v381
      %383 = vmatmul.f32.gmra.mxu0 %v320
      %v384 = vpop.f32.mrf.mxu0
      %v385 = vadd.f32 %v301, %v384
      %386 = vmatmul.f32.gmra.mxu0 %v323
      %v387 = vpop.f32.mrf.mxu0
      %v388 = vadd.f32 %v301, %v387
      %389 = vmatmul.f32.gmra.mxu0 %v326
      %v390 = vpop.f32.mrf.mxu0
      %v391 = vadd.f32 %v301, %v390
      %392 = vmatmul.f32.gmra.mxu0 %v329
      %v393 = vpop.f32.mrf.mxu0
      %v394 = vadd.f32 %v301, %v393
      %395 = vmatmul.f32.gmra.mxu0 %v332
      %v396 = vpop.f32.mrf.mxu0
      %v397 = vadd.f32 %v301, %v396
      %398 = vmatmul.f32.gmra.mxu0 %v335
      %v399 = vpop.f32.mrf.mxu0
      %v400 = vadd.f32 %v301, %v399
      %401 = vmatmul.f32.gmra.mxu0 %v338
      %v402 = vpop.f32.mrf.mxu0
      %v403 = vadd.f32 %v301, %v402
      %404 = vmatmul.f32.gmra.mxu0 %v341
      %v405 = vpop.f32.mrf.mxu0
      %v406 = vadd.f32 %v301, %v405
      %407 = vmatmul.f32.gmra.mxu0 %v344
      %v408 = vpop.f32.mrf.mxu0
      %v409 = vadd.f32 %v301, %v408
      %410 = vmatmul.f32.gmra.mxu0 %v347
      %v411 = vpop.f32.mrf.mxu0
      %v412 = vadd.f32 %v301, %v411
      %413 = vmatmul.f32.gmra.mxu0 %v350
      %v414 = vpop.f32.mrf.mxu0
      %v415 = vadd.f32 %v301, %v414
      %416 = vdwg.mxu0
      %v417 = vmax.f32 %v370, 0.0
      %v418 = vmax.f32 %v373, 0.0
      %v419 = vmax.f32 %v376, 0.0
      %v420 = vmax.f32 %v379, 0.0
      %v421 = vmax.f32 %v382, 0.0
      %v422 = vmax.f32 %v385, 0.0
      %v423 = vmax.f32 %v388, 0.0
      %v424 = vmax.f32 %v391, 0.0
      %v425 = vmax.f32 %v394, 0.0
      %v426 = vmax.f32 %v397, 0.0
      %v427 = vmax.f32 %v400, 0.0
      %v428 = vmax.f32 %v403, 0.0
      %v429 = vmax.f32 %v406, 0.0
      %v430 = vmax.f32 %v409, 0.0
      %v431 = vmax.f32 %v412, 0.0
      %v432 = vmax.f32 %v415, 0.0
      %v433 = vld [vmem:[%s3] sm:$0xff]
      %v434 = vld [vmem:[%s3 + $0x8] sm:$0xff]
      %v435 = vld [vmem:[%s3 + $0x10] sm:$0xff]
      %v436 = vld [vmem:[%s3 + $0x18] sm:$0xff]
      %v437 = vld [vmem:[%s3 + $0x20] sm:$0xff]
      %v438 = vld [vmem:[%s3 + $0x28] sm:$0xff]
      %v439 = vld [vmem:[%s3 + $0x30] sm:$0xff]
      %v440 = vld [vmem:[%s3 + $0x38] sm:$0xff]
      %v441 = vld [vmem:[%s3 + $0x40] sm:$0xff]
      %v442 = vld [vmem:[%s3 + $0x48] sm:$0xff]
      %v443 = vld [vmem:[%s3 + $0x50] sm:$0xff]
      %v444 = vld [vmem:[%s3 + $0x58] sm:$0xff]
      %v445 = vld [vmem:[%s3 + $0x60] sm:$0xff]
      %v446 = vld [vmem:[%s3 + $0x68] sm:$0xff]
      %v447 = vld [vmem:[%s3 + $0x70] sm:$0xff]
      %v448 = vld [vmem:[%s3 + $0x78] sm:$0xff]
      %v449 = vld [vmem:[%s4] sm:$0x1]
      %v451 = vperm.slane %v449, 0
      %453 = vmatpush.msra.mxu0 %v448
      %454 = vmatpush.msra.mxu0 %v447
      %455 = vmatpush.msra.mxu0 %v446
      %456 = vmatpush.msra.mxu0 %v445
      %457 = vmatpush.msra.mxu0 %v444
      %458 = vmatpush.msra.mxu0 %v443
      %459 = vmatpush.msra.mxu0 %v442
      %460 = vmatpush.msra.mxu0 %v441
      %461 = vmatpush.msra.mxu0 %v440
      %462 = vmatpush.msra.mxu0 %v439
      %463 = vmatpush.msra.mxu0 %v438
      %464 = vmatpush.msra.mxu0 %v437
      %465 = vmatpush.msra.mxu0 %v436
      %466 = vmatpush.msra.mxu0 %v435
      %467 = vmatpush.msra.mxu0 %v434
      %468 = vmatpush.msra.mxu0 %v433
      %469 = vmatmul.f32.gmra.mxu0 %v417
      %v470 = vpop.f32.mrf.mxu0
      %v471 = vadd.f32 %v451, %v470
      %472 = vmatmul.f32.gmra.mxu0 %v418
      %v473 = vpop.f32.mrf.mxu0
      %v474 = vadd.f32 %v451, %v473
      %475 = vmatmul.f32.gmra.mxu0 %v419
      %v476 = vpop.f32.mrf.mxu0
      %v477 = vadd.f32 %v451, %v476
      %478 = vmatmul.f32.gmra.mxu0 %v420
      %v479 = vpop.f32.mrf.mxu0
      %v480 = vadd.f32 %v451, %v479
      %481 = vmatmul.f32.gmra.mxu0 %v421
      %v482 = vpop.f32.mrf.mxu0
      %v483 = vadd.f32 %v451, %v482
      %484 = vmatmul.f32.gmra.mxu0 %v422
      %v485 = vpop.f32.mrf.mxu0
      %v486 = vadd.f32 %v451, %v485
      %487 = vmatmul.f32.gmra.mxu0 %v423
      %v488 = vpop.f32.mrf.mxu0
      %v489 = vadd.f32 %v451, %v488
      %490 = vmatmul.f32.gmra.mxu0 %v424
      %v491 = vpop.f32.mrf.mxu0
      %v492 = vadd.f32 %v451, %v491
      %493 = vmatmul.f32.gmra.mxu0 %v425
      %v494 = vpop.f32.mrf.mxu0
      %v495 = vadd.f32 %v451, %v494
      %496 = vmatmul.f32.gmra.mxu0 %v426
      %v497 = vpop.f32.mrf.mxu0
      %v498 = vadd.f32 %v451, %v497
      %499 = vmatmul.f32.gmra.mxu0 %v427
      %v500 = vpop.f32.mrf.mxu0
      %v501 = vadd.f32 %v451, %v500
      %502 = vmatmul.f32.gmra.mxu0 %v428
      %v503 = vpop.f32.mrf.mxu0
      %v504 = vadd.f32 %v451, %v503
      %505 = vmatmul.f32.gmra.mxu0 %v429
      %v506 = vpop.f32.mrf.mxu0
      %v507 = vadd.f32 %v451, %v506
      %508 = vmatmul.f32.gmra.mxu0 %v430
      %v509 = vpop.f32.mrf.mxu0
      %v510 = vadd.f32 %v451, %v509
      %511 = vmatmul.f32.gmra.mxu0 %v431
      %v512 = vpop.f32.mrf.mxu0
      %v513 = vadd.f32 %v451, %v512
      %514 = vmatmul.f32.gmra.mxu0 %v432
      %v515 = vpop.f32.mrf.mxu0
      %v516 = vadd.f32 %v451, %v515
      %517 = vdwg.mxu0
      %v518 = vmax.f32 %v471, 0.0
      %v519 = vmax.f32 %v474, 0.0
      %v520 = vmax.f32 %v477, 0.0
      %v521 = vmax.f32 %v480, 0.0
      %v522 = vmax.f32 %v483, 0.0
      %v523 = vmax.f32 %v486, 0.0
      %v524 = vmax.f32 %v489, 0.0
      %v525 = vmax.f32 %v492, 0.0
      %v526 = vmax.f32 %v495, 0.0
      %v527 = vmax.f32 %v498, 0.0
      %v528 = vmax.f32 %v501, 0.0
      %v529 = vmax.f32 %v504, 0.0
      %v530 = vmax.f32 %v507, 0.0
      %v531 = vmax.f32 %v510, 0.0
      %v532 = vmax.f32 %v513, 0.0
      %v533 = vmax.f32 %v516, 0.0
      %v534 = vld [vmem:[%s5] sm:$0xff]
      %v535 = vld [vmem:[%s5 + $0x8] sm:$0xff]
      %v536 = vld [vmem:[%s5 + $0x10] sm:$0xff]
      %v537 = vld [vmem:[%s5 + $0x18] sm:$0xff]
      %v538 = vld [vmem:[%s5 + $0x20] sm:$0xff]
      %v539 = vld [vmem:[%s5 + $0x28] sm:$0xff]
      %v540 = vld [vmem:[%s5 + $0x30] sm:$0xff]
      %v541 = vld [vmem:[%s5 + $0x38] sm:$0xff]
      %v542 = vld [vmem:[%s5 + $0x40] sm:$0xff]
      %v543 = vld [vmem:[%s5 + $0x48] sm:$0xff]
      %v544 = vld [vmem:[%s5 + $0x50] sm:$0xff]
      %v545 = vld [vmem:[%s5 + $0x58] sm:$0xff]
      %v546 = vld [vmem:[%s5 + $0x60] sm:$0xff]
      %v547 = vld [vmem:[%s5 + $0x68] sm:$0xff]
      %v548 = vld [vmem:[%s5 + $0x70] sm:$0xff]
      %v549 = vld [vmem:[%s5 + $0x78] sm:$0xff]
      %v550 = vld [vmem:[%s6] sm:$0x1]
      %v552 = vperm.slane %v550, 0
      %554 = vmatpush.msra.mxu0 %v549
      %555 = vmatpush.msra.mxu0 %v548
      %556 = vmatpush.msra.mxu0 %v547
      %557 = vmatpush.msra.mxu0 %v546
      %558 = vmatpush.msra.mxu0 %v545
      %559 = vmatpush.msra.mxu0 %v544
      %560 = vmatpush.msra.mxu0 %v543
      %561 = vmatpush.msra.mxu0 %v542
      %562 = vmatpush.msra.mxu0 %v541
      %563 = vmatpush.msra.mxu0 %v540
      %564 = vmatpush.msra.mxu0 %v539
      %565 = vmatpush.msra.mxu0 %v538
      %566 = vmatpush.msra.mxu0 %v537
      %567 = vmatpush.msra.mxu0 %v536
      %568 = vmatpush.msra.mxu0 %v535
      %569 = vmatpush.msra.mxu0 %v534
      %570 = vmatmul.f32.gmra.mxu0 %v518
      %v571 = vpop.f32.mrf.mxu0
      %v572 = vadd.f32 %v552, %v571
      %573 = vmatmul.f32.gmra.mxu0 %v519
      %v574 = vpop.f32.mrf.mxu0
      %v575 = vadd.f32 %v552, %v574
      %576 = vmatmul.f32.gmra.mxu0 %v520
      %v577 = vpop.f32.mrf.mxu0
      %v578 = vadd.f32 %v552, %v577
      %579 = vmatmul.f32.gmra.mxu0 %v521
      %v580 = vpop.f32.mrf.mxu0
      %v581 = vadd.f32 %v552, %v580
      %582 = vmatmul.f32.gmra.mxu0 %v522
      %v583 = vpop.f32.mrf.mxu0
      %v584 = vadd.f32 %v552, %v583
      %585 = vmatmul.f32.gmra.mxu0 %v523
      %v586 = vpop.f32.mrf.mxu0
      %v587 = vadd.f32 %v552, %v586
      %588 = vmatmul.f32.gmra.mxu0 %v524
      %v589 = vpop.f32.mrf.mxu0
      %v590 = vadd.f32 %v552, %v589
      %591 = vmatmul.f32.gmra.mxu0 %v525
      %v592 = vpop.f32.mrf.mxu0
      %v593 = vadd.f32 %v552, %v592
      %594 = vmatmul.f32.gmra.mxu0 %v526
      %v595 = vpop.f32.mrf.mxu0
      %v596 = vadd.f32 %v552, %v595
      %597 = vmatmul.f32.gmra.mxu0 %v527
      %v598 = vpop.f32.mrf.mxu0
      %v599 = vadd.f32 %v552, %v598
      %600 = vmatmul.f32.gmra.mxu0 %v528
      %v601 = vpop.f32.mrf.mxu0
      %v602 = vadd.f32 %v552, %v601
      %603 = vmatmul.f32.gmra.mxu0 %v529
      %v604 = vpop.f32.mrf.mxu0
      %v605 = vadd.f32 %v552, %v604
      %606 = vmatmul.f32.gmra.mxu0 %v530
      %v607 = vpop.f32.mrf.mxu0
      %v608 = vadd.f32 %v552, %v607
      %609 = vmatmul.f32.gmra.mxu0 %v531
      %v610 = vpop.f32.mrf.mxu0
      %v611 = vadd.f32 %v552, %v610
      %612 = vmatmul.f32.gmra.mxu0 %v532
      %v613 = vpop.f32.mrf.mxu0
      %v614 = vadd.f32 %v552, %v613
      %615 = vmatmul.f32.gmra.mxu0 %v533
      %v616 = vpop.f32.mrf.mxu0
      %v617 = vadd.f32 %v552, %v616
      %618 = vdwg.mxu0
      %vm619 = vcmask 31744
      %620 = vst.msk [vmem:[%s280] sm:$0xff] %vm619, %v572
      %621 = vst.msk [vmem:[%s280 + $0x8] sm:$0xff] %vm619, %v575
      %622 = vst.msk [vmem:[%s280 + $0x10] sm:$0xff] %vm619, %v578
      %623 = vst.msk [vmem:[%s280 + $0x18] sm:$0xff] %vm619, %v581
      %624 = vst.msk [vmem:[%s280 + $0x20] sm:$0xff] %vm619, %v584
      %625 = vst.msk [vmem:[%s280 + $0x28] sm:$0xff] %vm619, %v587
      %626 = vst.msk [vmem:[%s280 + $0x30] sm:$0xff] %vm619, %v590
      %627 = vst.msk [vmem:[%s280 + $0x38] sm:$0xff] %vm619, %v593
      %628 = vst.msk [vmem:[%s280 + $0x40] sm:$0xff] %vm619, %v596
      %629 = vst.msk [vmem:[%s280 + $0x48] sm:$0xff] %vm619, %v599
      %630 = vst.msk [vmem:[%s280 + $0x50] sm:$0xff] %vm619, %v602
      %631 = vst.msk [vmem:[%s280 + $0x58] sm:$0xff] %vm619, %v605
      %632 = vst.msk [vmem:[%s280 + $0x60] sm:$0xff] %vm619, %v608
      %633 = vst.msk [vmem:[%s280 + $0x68] sm:$0xff] %vm619, %v611
      %634 = vst.msk [vmem:[%s280 + $0x70] sm:$0xff] %vm619, %v614
      %635 = vst.msk [vmem:[%s280 + $0x78] sm:$0xff] %vm619, %v617
      %s636 = smul.u32 16, %s18
      %p637 = scmp.lt.s32.totalorder %s636, 31
      %s638 = scalar_select %p637, %s636, 31
      %s639 = smul.addr %s638, 8
      %s640 = scalar_lea.vmem %s7, %s639
      // Predicated region
      $region49: #{tpu_custom_call.1} parent=47 // pred_check
        %p641 = pneg %p188
      $region50: #{tpu_custom_call.1} parent=47 // pred_check_branch
        %643 = sbr.rel (%p641) target = $region52
      $region51: #{tpu_custom_call.1} parent=47 // pred_region
        %s644 = smul.u32 16, %s18
      $region52: #{tpu_custom_call.1} parent=47 // pred_fallthru
        _
    $region48: #{tpu_custom_call.1} parent=5 // pred_fallthru
      _
    %p645 = scmp.le.s32.totalorder 2, %s13
    // Predicated region
    $region53: #{tpu_custom_call.1} parent=5 // pred_check
      %p646 = pneg %p645
    $region54: #{tpu_custom_call.1} parent=5 // pred_check_branch
      %648 = sbr.rel (%p646) target = $region56
    $region55: #{tpu_custom_call.1} parent=5 // pred_region
      %s649 = ssub.s32 %s13, 2
      // Predicated region
      $region57: #{tpu_custom_call.1} parent=55 // pred_check
        %p650 = pneg %p194
      $region58: #{tpu_custom_call.1} parent=55 // pred_check_branch
        %652 = sbr.rel (%p650) target = $region60
      $region59: #{tpu_custom_call.1} parent=55 // pred_region
        %s653 = smul.u32 16, %s19
        %p654 = scmp.lt.s32.totalorder %s653, 31
        %s655 = scalar_select %p654, %s653, 31
        %s656 = smul.addr %s655, 8
        %s657 = scalar_lea.vmem %s7, %s656
      $region60: #{tpu_custom_call.1} parent=55 // pred_fallthru
        _
    $region56: #{tpu_custom_call.1} parent=5 // pred_fallthru
      _
  $region6: #{tpu_custom_call.1} parent=0 // loop_footer
    %s17 = sadd.s32 1, %s13
  $region7: #{tpu_custom_call.1} parent=0 // loop_footer_branch
    %12 = sbr.rel target = $region3
  $region8: #{tpu_custom_call.1} parent=0 // loop_exit
    _

</llo_original>
